<compile_context>
chip_gen: v6e
topology: v6e:2x2x1
jax: 0.10.0
libtpu: 0.0.40
codegen_flags: <defaults>
</compile_context>

<pallas_src>
import jax
import jax.numpy as jnp
from jax.experimental import pallas as pl
from jax.experimental.pallas import tpu as pltpu


def _swish_kernel(x_ref, o_ref):
    xf = x_ref[...].astype(jnp.float32)
    # Numerically-stable sigmoid: z = exp(-|x|) in (0, 1], never overflows.
    z = jnp.exp(-jnp.abs(xf))                      # EUP
    sig = jnp.where(xf >= 0, 1.0, z) / (1.0 + z)   # sigmoid(x) for both signs
    o_ref[...] = (xf * sig).astype(o_ref.dtype)


def swish(x, *, target_block_bytes=2 << 20):
    """Elementwise swish: x * sigmoid(x). Any float dtype / shape."""
    orig_shape = x.shape
    dtype = x.dtype
    n = x.size
    itemsize = jnp.dtype(dtype).itemsize

    # Widest lane-dense last dim that divides n exactly (no padding copy).
    lanes = None
    for cand in (2048, 1024, 512, 256, 128):
        if n % cand == 0:
            lanes = cand
            break

    if lanes is None:
        # Rare ragged total size (not a multiple of 128).
        if n * itemsize <= target_block_bytes:
            # Whole array as a single block; full-shape block sidesteps the
            # (8,128) divisibility rule.
            return pl.pallas_call(
                _swish_kernel,
                out_shape=jax.ShapeDtypeStruct(orig_shape, dtype),
            )(x)
        # 1-D blocks; the ragged final block is masked by Pallas.
        x1d = x.reshape(n)
        block = min(target_block_bytes // itemsize, n)
        block = max(1024, (block // 1024) * 1024)
        out1d = pl.pallas_call(
            _swish_kernel,
            out_shape=jax.ShapeDtypeStruct((n,), dtype),
            grid=(pl.cdiv(n, block),),
            in_specs=[pl.BlockSpec((block,), lambda i: (i,))],
            out_specs=pl.BlockSpec((block,), lambda i: (i,)),
            compiler_params=pltpu.CompilerParams(
                dimension_semantics=("parallel",)
            ),
        )(x1d)
        return out1d.reshape(orig_shape)

    rows = n // lanes
    x2d = x.reshape(rows, lanes)  # metadata-only reshape, no HBM copy

    # ~target_block_bytes per block, sublane (8) aligned rows.
    block_rows = target_block_bytes // (lanes * itemsize)
    block_rows = max(8, (min(block_rows, rows) // 8) * 8)
    if block_rows >= rows:
        # Single block covering the full slab (small-input fast path).
        block_rows = rows

    out2d = pl.pallas_call(
        _swish_kernel,
        out_shape=jax.ShapeDtypeStruct((rows, lanes), dtype),
        grid=(pl.cdiv(rows, block_rows),),
        in_specs=[pl.BlockSpec((block_rows, lanes), lambda i: (i, 0))],
        out_specs=pl.BlockSpec((block_rows, lanes), lambda i: (i, 0)),
        compiler_params=pltpu.CompilerParams(
            dimension_semantics=("parallel",)
        ),
    )(x2d)
    return out2d.reshape(orig_shape)


if __name__ == "__main__":
    key = jax.random.PRNGKey(0)

    # Small NCHW input consistent with how Swish is used inside conv nets.
    x = jax.random.normal(key, (2, 4, 16, 16), dtype=jnp.float32)
    y = swish(x)
    jax.block_until_ready(y)
    y_ref = x * jax.nn.sigmoid(x)
    assert y.shape == x.shape and y.dtype == x.dtype
    assert jnp.max(jnp.abs(y - y_ref)) < 1e-5

    # Exercise the multi-block tiled path as well (still small & fast).
    x_big = jax.random.normal(key, (8, 32, 64, 64), dtype=jnp.float32)
    y_big = swish(x_big)
    jax.block_until_ready(y_big)
    y_big_ref = x_big * jax.nn.sigmoid(x_big)
    assert jnp.max(jnp.abs(y_big - y_big_ref)) < 1e-5

    print("KERNEL_OK")
</pallas_src>

<mosaic_0001>
module attributes {stable_mosaic.version = 11 : i64} {
  func.func @_swish_kernel(%arg0: i32, %arg1: memref<1x2048xf32, #tpu.memory_space<vmem>>, %arg2: memref<1x2048xf32, #tpu.memory_space<vmem>>) attributes {dimension_semantics = [#tpu.dimension_semantics<parallel>], iteration_bounds = array<i64: 1>, scalar_prefetch = 0 : i64, scratch_operands = 0 : i64, tpu.core_type = #tpu.core_type<tc>, window_params = [{transform_indices = @transform_0, window_bounds = array<i64: 1, 2048>}, {transform_indices = @transform_1, window_bounds = array<i64: 1, 2048>}]} {
    %c0 = arith.constant 0 : index
    %c0_0 = arith.constant 0 : index
    %0 = vector.load %arg1[%c0, %c0_0] : memref<1x2048xf32, #tpu.memory_space<vmem>>, vector<1x2048xf32>
    %1 = math.absf %0 : vector<1x2048xf32>
    %cst = arith.constant 0.000000e+00 : f32
    %2 = vector.broadcast %cst : f32 to vector<1x2048xf32>
    %3 = arith.subf %2, %1 : vector<1x2048xf32>
    %4 = math.exp %3 : vector<1x2048xf32>
    %cst_1 = arith.constant 0.000000e+00 : f32
    %5 = vector.broadcast %cst_1 : f32 to vector<1x2048xf32>
    %6 = arith.cmpf oge, %0, %5 : vector<1x2048xf32>
    %cst_2 = arith.constant 1.000000e+00 : f32
    %7 = vector.broadcast %cst_2 : f32 to vector<1x2048xf32>
    %8 = arith.select %6, %7, %4 : vector<1x2048xi1>, vector<1x2048xf32>
    %cst_3 = arith.constant 1.000000e+00 : f32
    %9 = vector.broadcast %cst_3 : f32 to vector<1x2048xf32>
    %10 = arith.addf %9, %4 : vector<1x2048xf32>
    %11 = arith.divf %8, %10 : vector<1x2048xf32>
    %12 = arith.mulf %0, %11 : vector<1x2048xf32>
    %c0_4 = arith.constant 0 : index
    %c0_5 = arith.constant 0 : index
    %13 = vector.load %arg2[%c0_4, %c0_5] : memref<1x2048xf32, #tpu.memory_space<vmem>>, vector<1x2048xf32>
    tpu.vector_store %arg2[%c0_4, %c0_5], %12 {strides = array<i32>} : memref<1x2048xf32, #tpu.memory_space<vmem>>, vector<1x2048xf32>,
    return
  }
  func.func @transform_0(%arg0: i32) -> (i32, i32) {
    %c0_i32 = arith.constant 0 : i32
    %c0_i32_0 = arith.constant 0 : i32
    return %arg0, %c0_i32 : i32, i32
  }
  func.func @transform_1(%arg0: i32) -> (i32, i32) {
    %c0_i32 = arith.constant 0 : i32
    %c0_i32_0 = arith.constant 0 : i32
    return %arg0, %c0_i32 : i32, i32
  }
}

</mosaic_0001>

<llo_original>
// kernel: tpu_custom_call.1
$region0: #{tpu_custom_call.1}
  #allocation0 [shape = 'u32[]', space=smem, size = 0x4, offset = 0x4, fixed_abs, tag = 'smem constant byte address 0x4 - core index']
  #allocation1 [shape = 'u32[144,128]{1,0:T(1,128)}', space=vmem, size = 0x12000, scoped, tag = 'internal scratch']
  %s0 = inlined_call_operand.hbm [shape: f32[1,2048], index: 0, kind: input, shape index: {}]
  %s1 = inlined_call_operand.hbm [shape: f32[1,2048], index: 1, kind: output, shape index: {}]
  %s2 = sld [smem:[#allocation0]]
  $region18: #{tpu_custom_call.1} parent=0
    _
  %s4 = ssub.s32 1, %s2
  %s5 = scalar_select 0, %s4, %s2
  $region1: #{tpu_custom_call.1} parent=0
    #allocation2 [shape = 'u8[8192]{0}', space=vmem, size = 0x2000, scoped, tag = 'input window, operand 0, single buffered']
    #allocation3 [shape = 's32[1]{0}', space=sflag, size = 0x4, scoped, tag = 'scoped memory for tpu_custom_call.1']
    #allocation4 [shape = 's32[1]{0}', space=sflag, size = 0x4, scoped, tag = 'scoped memory for tpu_custom_call.1']
    #allocation5 [shape = 'u8[8192]{0}', space=vmem, size = 0x2000, scoped, tag = 'output window, operand 0, single buffered']
    %6 = vsyncpa [#allocation3], 0
    %7 = vsyncpa [#allocation4], 0
    // Predicated region
    $region2: #{tpu_custom_call.1} parent=1 // pred_check
      _
    $region3: #{tpu_custom_call.1} parent=1 // pred_check_branch
      %9 = sbr.rel (0) target = $region5
    $region4: #{tpu_custom_call.1} parent=1 // pred_region
      %s11 = ssub.s32 256, 256
      %12 = vsyncadd [#allocation3], %s11
      %s14 = sshll.u32 [#allocation2], 4
      %s15 = int_to_ptr.vmem [resolvable:$true] %s14
      %17 = dma.hbm_to_vmem [thread:$0]  %s0, 256, %s15, [#allocation3]
    $region5: #{tpu_custom_call.1} parent=1 // pred_fallthru
      _
    // Predicated region
    $region6: #{tpu_custom_call.1} parent=1 // pred_check
      _
    $region7: #{tpu_custom_call.1} parent=1 // pred_check_branch
      %19 = sbr.rel (0) target = $region9
    $region8: #{tpu_custom_call.1} parent=1 // pred_region
      %20 = dma.done [#allocation3], 256
    $region9: #{tpu_custom_call.1} parent=1 // pred_fallthru
      _
    %v21 = vld [vmem:[#allocation2] sm:$0xff]
    %v22 = vld [vmem:[#allocation2 + $0x8] sm:$0xff]
    %v23 = vand.u32 2147483647, %v21
    %v24 = vand.u32 2147483647, %v22
    %v25 = vsub.f32 0.0, %v23
    %v26 = vsub.f32 0.0, %v24
    %v27 = vmul.f32 %v25, 1.442695
    %v28 = vpow.pop %v27
    %v29 = vmul.f32 %v26, 1.442695
    %v30 = vpow.pop %v29
    %vm31 = vcmp.ge.f32.partialorder %v21, 0.0
    %vm32 = vcmp.ge.f32.partialorder %v22, 0.0
    %v33 = vsel %vm31, 1.0, %v28
    %v34 = vsel %vm32, 1.0, %v30
    %v35 = vadd.f32 %v28, 1.0
    %v36 = vadd.f32 %v30, 1.0
    %v37 = vrcp.pop %v35
    %v38 = vmul.f32 %v33, %v37
    %v39 = vrcp.pop %v36
    %v40 = vmul.f32 %v34, %v39
    %v41 = vmul.f32 %v21, %v38
    %v42 = vmul.f32 %v22, %v40
    %43 = vst [vmem:[#allocation5] sm:$0xff] %v41
    %44 = vst [vmem:[#allocation5 + $0x8] sm:$0xff] %v42
    // Predicated region
    $region10: #{tpu_custom_call.1} parent=1 // pred_check
      _
    $region11: #{tpu_custom_call.1} parent=1 // pred_check_branch
      %46 = sbr.rel (0) target = $region13
    $region12: #{tpu_custom_call.1} parent=1 // pred_region
      %s48 = ssub.s32 256, 256
      %49 = vsyncadd [#allocation4], %s48
      %s51 = sshll.u32 [#allocation5], 4
      %s52 = int_to_ptr.vmem [resolvable:$true] %s51
      %54 = dma.vmem_to_hbm [thread:$0]  %s52, 256, %s1, [#allocation4]
    $region13: #{tpu_custom_call.1} parent=1 // pred_fallthru
      _
    // Predicated region
    $region14: #{tpu_custom_call.1} parent=1 // pred_check
      _
    $region15: #{tpu_custom_call.1} parent=1 // pred_check_branch
      %56 = sbr.rel (0) target = $region17
    $region16: #{tpu_custom_call.1} parent=1 // pred_region
      %57 = dma.done [#allocation4], 256
    $region17: #{tpu_custom_call.1} parent=1 // pred_fallthru
      _
    %58 = vsyncpa [#allocation3], 1
    %59 = vsyncpa [#allocation4], 1

</llo_original>
